<compile_context>
chip_gen: v7x
topology: tpu7x:2x2x1
jax: 0.10.0
libtpu: 0.0.40
codegen_flags: <defaults>
</compile_context>

<pallas_src>
import numpy as np
import jax
import jax.numpy as jnp
from jax.experimental import pallas as pl
from jax.experimental.pallas import tpu as pltpu


def _round_up(a, b):
    return (a + b - 1) // b * b


def _feature_embed_kernel(x_ref, w_ref, b_ref, o_ref, acc_ref):
    # Tiled masked-linear hot path: the mask is already folded into w_ref,
    # operands are bf16, accumulation is f32.
    k = pl.program_id(2)

    @pl.when(k == 0)
    def _():
        acc_ref[...] = jnp.zeros_like(acc_ref)

    acc_ref[...] += jnp.dot(x_ref[...], w_ref[...],
                            preferred_element_type=jnp.float32)

    @pl.when(k == pl.num_programs(2) - 1)
    def _():
        o_ref[...] = (acc_ref[...] + b_ref[...]).astype(o_ref.dtype)


def feature_embed_prepare(weight, bias, mask_base, *, num_patches, embed_dim,
                          tn=None, tk=None, param_dtype=jnp.bfloat16):
    """One-time prep (module __init__ equivalent).

    * folds the repeated connectivity mask into the weight (no mask stream at forward),
    * permutes output columns so the flat kernel output is already (N, P, E) ordered,
      exactly reproducing rearrange 'h (w c) -> h c w', c=num_patches,
    * zero-pads weight/bias to the tile grid ONCE and casts the weight to bf16.
    """
    G, O = weight.shape
    assert O == num_patches * embed_dim
    assert mask_base.shape == (G, num_patches)

    # Large lane-dense tiles by default (multiples of 128 on the lane dim).
    tn = tn if tn is not None else min(1024, _round_up(O, 128))
    tk = tk if tk is not None else min(1024, _round_up(G, 128))

    # Megacore: make sure the j (output-column) axis has >= 2 blocks when O allows,
    # so a small-batch call still feeds both v7x TensorCores.
    O_pad = _round_up(O, tn)
    if O_pad // tn < 2 and O_pad >= 256 and (O_pad // 2) % 128 == 0:
        tn = O_pad // 2
        O_pad = _round_up(O, tn)
    G_pad = _round_up(G, tk)

    # np.repeat(mask, embed_dim, axis=1): patch-major column grouping, as in the module.
    mask_full = jnp.repeat(mask_base.astype(weight.dtype), embed_dim, axis=1)  # (G, P*E)
    w_masked = weight * mask_full

    # rearrange reads flat column o as o = e*num_patches + p.
    # New column j = p*embed_dim + e takes old column e*num_patches + p.
    old_cols = (jnp.arange(embed_dim)[None, :] * num_patches
                + jnp.arange(num_patches)[:, None]).reshape(-1)                # (O,)
    w_perm = w_masked[:, old_cols]
    b_perm = bias[old_cols]

    # One-time pad (zero rows/cols contribute nothing) + narrow cast of the big operand.
    w_perm = jnp.pad(w_perm, ((0, G_pad - G), (0, O_pad - O))).astype(param_dtype)
    b_perm = jnp.pad(b_perm, (0, O_pad - O)).astype(jnp.float32).reshape(1, O_pad)

    return dict(w=w_perm, b=b_perm, tn=tn, tk=tk,
                G=G, O=O, G_pad=G_pad, O_pad=O_pad,
                num_patches=num_patches, embed_dim=embed_dim)


def feature_embed_forward(x, params, *, tm=None, tn=None, tk=None,
                          out_dtype=jnp.float32):
    """x: (N, G) activations.  params: output of feature_embed_prepare.

    Returns (N, num_patches, embed_dim) in out_dtype."""
    N, G = x.shape
    assert G == params["G"]
    num_patches, embed_dim = params["num_patches"], params["embed_dim"]
    O, G_pad, O_pad = params["O"], params["G_pad"], params["O_pad"]

    tn = tn if tn is not None else params["tn"]
    tk = tk if tk is not None else params["tk"]
    assert O_pad % tn == 0 and G_pad % tk == 0, "tn/tk must divide the prep-padded dims"

    # bf16 operands -> sublane packing of 16 on the row tile.
    tm = tm if tm is not None else min(512, _round_up(N, 16))
    N_pad = _round_up(N, tm)

    in_dtype = params["w"].dtype
    x = x.astype(in_dtype)
    if (N_pad, G_pad) != (N, G):
        # Zero-pad only the (small) activation tensor per call; padded genes hit
        # zero-padded weight rows, padded cells are sliced off below.
        x = jnp.pad(x, ((0, N_pad - N), (0, G_pad - G)))

    grid = (N_pad // tm, O_pad // tn, G_pad // tk)

    in_bytes = jnp.dtype(in_dtype).itemsize
    out_bytes = jnp.dtype(out_dtype).itemsize
    # Double-buffered input/output blocks + resident f32 accumulator.
    est_vmem = (2 * (tm * tk * in_bytes + tk * tn * in_bytes + tn * 4
                     + tm * tn * out_bytes) + tm * tn * 4)
    vmem_limit = min(max(int(1.5 * est_vmem), 16 << 20), 48 << 20)

    cost = pl.CostEstimate(
        flops=2 * N_pad * G_pad * O_pad,
        transcendentals=0,
        bytes_accessed=(N_pad * G_pad * in_bytes * (O_pad // tn)       # x re-reads
                        + G_pad * O_pad * in_bytes * (N_pad // tm)     # w re-reads
                        + O_pad * 4                                    # bias
                        + N_pad * O_pad * out_bytes))                  # output

    y_flat = pl.pallas_call(
        _feature_embed_kernel,
        out_shape=jax.ShapeDtypeStruct((N_pad, O_pad), out_dtype),
        grid_spec=pltpu.PrefetchScalarGridSpec(
            num_scalar_prefetch=0,
            grid=grid,
            in_specs=[
                pl.BlockSpec((tm, tk), lambda i, j, k: (i, k)),   # activations (bf16)
                pl.BlockSpec((tk, tn), lambda i, j, k: (k, j)),   # masked+permuted weight (bf16)
                pl.BlockSpec((1, tn), lambda i, j, k: (0, j)),    # bias (f32, lane-dense)
            ],
            out_specs=pl.BlockSpec((tm, tn), lambda i, j, k: (i, j)),
            scratch_shapes=[pltpu.VMEM((tm, tn), jnp.float32)],
        ),
        compiler_params=pltpu.CompilerParams(
            dimension_semantics=("parallel", "parallel", "arbitrary"),
            vmem_limit_bytes=vmem_limit),
        cost_estimate=cost,
    )(x, params["w"], params["b"])

    y_flat = y_flat[:N, :O]
    # Columns are already (patch, embed)-ordered -> pure reshape, no transpose.
    return y_flat.reshape(N, num_patches, embed_dim)                # norm = Identity


if __name__ == "__main__":
    # Small, deterministic config; sizes deliberately not multiples of the tiles so the
    # padding paths are exercised.
    num_cells = 20
    num_genes = 300
    num_patches = 8
    embed_dim = 32
    out_dim = num_patches * embed_dim                               # 256

    key = jax.random.PRNGKey(0)
    k_x, k_w, k_b, k_m = jax.random.split(key, 4)

    x = jax.random.normal(k_x, (num_cells, num_genes), dtype=jnp.float32)
    weight = (jax.random.normal(k_w, (num_genes, out_dim), dtype=jnp.float32)
              * (1.0 / np.sqrt(num_genes)))
    bias = jax.random.normal(k_b, (out_dim,), dtype=jnp.float32) * 0.01
    mask_base = (jax.random.uniform(k_m, (num_genes, num_patches)) < 0.5
                 ).astype(jnp.float32)

    # One-time prep: fold mask into weight, permute + pad columns, cast to bf16.
    params = feature_embed_prepare(weight, bias, mask_base,
                                   num_patches=num_patches, embed_dim=embed_dim)

    # Default tiles: grid (1, 2, 1) here (2 parallel j blocks for megacore), f32 output.
    out = feature_embed_forward(x, params)
    out = jax.block_until_ready(out)

    # Small tiles -> (2, 2, 3) grid with padding on every axis: exercises the
    # accumulator init / k-accumulate / finalize path.  bf16 output covers the
    # narrow-writeback option.
    out_tiled = feature_embed_forward(x, params, tm=16, tn=128, tk=128,
                                      out_dtype=jnp.bfloat16)
    out_tiled = jax.block_until_ready(out_tiled)

    # Reference: exact PyTorch-module semantics (f32 masked linear + rearrange).
    mask_full = jnp.repeat(mask_base, embed_dim, axis=1)
    ref_flat = x @ (weight * mask_full) + bias
    ref = jnp.transpose(ref_flat.reshape(num_cells, embed_dim, num_patches), (0, 2, 1))

    assert out.shape == (num_cells, num_patches, embed_dim)
    assert out_tiled.shape == (num_cells, num_patches, embed_dim)
    # bf16 operand rounding (f32 accumulation) -> loosened tolerance vs f32 reference.
    np.testing.assert_allclose(np.asarray(out), np.asarray(ref),
                               rtol=3e-2, atol=3e-2)
    np.testing.assert_allclose(np.asarray(out_tiled, dtype=np.float32), np.asarray(ref),
                               rtol=5e-2, atol=5e-2)

    print("KERNEL_OK")
</pallas_src>

<mosaic_0001>
module attributes {stable_mosaic.version = 11 : i64} {
  func.func @_feature_embed_kernel(%arg0: i32, %arg1: i32, %arg2: i32, %arg3: memref<32x384xbf16, #tpu.memory_space<vmem>>, %arg4: memref<384x128xbf16, #tpu.memory_space<vmem>>, %arg5: memref<1x128xf32, #tpu.memory_space<vmem>>, %arg6: memref<32x128xf32, #tpu.memory_space<vmem>>, %arg7: memref<32x128xf32, #tpu.memory_space<vmem>>) attributes {dimension_semantics = [#tpu.dimension_semantics<parallel>, #tpu.dimension_semantics<parallel>, #tpu.dimension_semantics<arbitrary>], iteration_bounds = array<i64: 1, 2, 1>, scalar_prefetch = 0 : i64, scratch_operands = 1 : i64, tpu.core_type = #tpu.core_type<tc>, window_params = [{transform_indices = @transform_0, window_bounds = array<i64: 32, 384>}, {transform_indices = @transform_1, window_bounds = array<i64: 384, 128>}, {transform_indices = @transform_2, window_bounds = array<i64: 1, 128>}, {transform_indices = @transform_3, window_bounds = array<i64: 32, 128>}]} {
    %c0_i32 = arith.constant 0 : i32
    %0 = arith.cmpi eq, %arg2, %c0_i32 : i32
    %1 = arith.extui %0 : i1 to i32
    %c0_i32_0 = arith.constant 0 : i32
    %2 = arith.cmpi ne, %1, %c0_i32_0 : i32
    scf.if %2 {
      %cst_10 = arith.constant 0.000000e+00 : f32
      %12 = vector.broadcast %cst_10 : f32 to vector<32x128xf32>
      %c0_11 = arith.constant 0 : index
      %c0_12 = arith.constant 0 : index
      %13 = vector.load %arg7[%c0_11, %c0_12] : memref<32x128xf32, #tpu.memory_space<vmem>>, vector<32x128xf32>
      tpu.vector_store %arg7[%c0_11, %c0_12], %12 {strides = array<i32>} : memref<32x128xf32, #tpu.memory_space<vmem>>, vector<32x128xf32>,
    } else {
    }
    %c0 = arith.constant 0 : index
    %c0_1 = arith.constant 0 : index
    %3 = vector.load %arg7[%c0, %c0_1] : memref<32x128xf32, #tpu.memory_space<vmem>>, vector<32x128xf32>
    %c0_2 = arith.constant 0 : index
    %c0_3 = arith.constant 0 : index
    %4 = vector.load %arg3[%c0_2, %c0_3] : memref<32x384xbf16, #tpu.memory_space<vmem>>, vector<32x384xbf16>
    %c0_4 = arith.constant 0 : index
    %c0_5 = arith.constant 0 : index
    %5 = vector.load %arg4[%c0_4, %c0_5] : memref<384x128xbf16, #tpu.memory_space<vmem>>, vector<384x128xbf16>
    %cst = arith.constant dense<0.000000e+00> : vector<32x128xf32>
    %6 = tpu.matmul %4, %5, %cst {dimension_numbers = #tpu.dot_dimension_numbers<[1], [0], [0], [1], [0, 0, 1, 1], [], []>} : vector<32x384xbf16>, vector<384x128xbf16>, vector<32x128xf32> -> vector<32x128xf32>
    %7 = arith.addf %3, %6 : vector<32x128xf32>
    %c0_6 = arith.constant 0 : index
    %c0_7 = arith.constant 0 : index
    %8 = vector.load %arg7[%c0_6, %c0_7] : memref<32x128xf32, #tpu.memory_space<vmem>>, vector<32x128xf32>
    tpu.vector_store %arg7[%c0_6, %c0_7], %7 {strides = array<i32>} : memref<32x128xf32, #tpu.memory_space<vmem>>, vector<32x128xf32>,
    %c0_i32_8 = arith.constant 0 : i32
    %9 = arith.cmpi eq, %arg2, %c0_i32_8 : i32
    %10 = arith.extui %9 : i1 to i32
    %c0_i32_9 = arith.constant 0 : i32
    %11 = arith.cmpi ne, %10, %c0_i32_9 : i32
    scf.if %11 {
      %c0_10 = arith.constant 0 : index
      %c0_11 = arith.constant 0 : index
      %12 = vector.load %arg7[%c0_10, %c0_11] : memref<32x128xf32, #tpu.memory_space<vmem>>, vector<32x128xf32>
      %c0_12 = arith.constant 0 : index
      %c0_13 = arith.constant 0 : index
      %13 = vector.load %arg5[%c0_12, %c0_13] : memref<1x128xf32, #tpu.memory_space<vmem>>, vector<1x128xf32>
      %14 = vector.broadcast %13 : vector<1x128xf32> to vector<32x128xf32>
      %15 = arith.addf %12, %14 : vector<32x128xf32>
      %c0_14 = arith.constant 0 : index
      %c0_15 = arith.constant 0 : index
      %16 = vector.load %arg6[%c0_14, %c0_15] : memref<32x128xf32, #tpu.memory_space<vmem>>, vector<32x128xf32>
      tpu.vector_store %arg6[%c0_14, %c0_15], %15 {strides = array<i32>} : memref<32x128xf32, #tpu.memory_space<vmem>>, vector<32x128xf32>,
    } else {
    }
    return
  }
  func.func @transform_0(%arg0: i32, %arg1: i32, %arg2: i32) -> (i32, i32) {
    %c0_i32 = arith.constant 0 : i32
    return %arg0, %arg2 : i32, i32
  }
  func.func @transform_1(%arg0: i32, %arg1: i32, %arg2: i32) -> (i32, i32) {
    %c0_i32 = arith.constant 0 : i32
    return %arg2, %arg1 : i32, i32
  }
  func.func @transform_2(%arg0: i32, %arg1: i32, %arg2: i32) -> (i32, i32) {
    %c0_i32 = arith.constant 0 : i32
    %c0_i32_0 = arith.constant 0 : i32
    return %c0_i32, %arg1 : i32, i32
  }
  func.func @transform_3(%arg0: i32, %arg1: i32, %arg2: i32) -> (i32, i32) {
    %c0_i32 = arith.constant 0 : i32
    return %arg0, %arg1 : i32, i32
  }
}

</mosaic_0001>

<llo_original>
// kernel: tpu_custom_call.1
$region0: #{tpu_custom_call.1}
  #allocation0 [shape = 'u32[]', space=smem, size = 0x4, offset = 0x4, fixed_abs, tag = 'smem constant byte address 0x4 - core index']
  #allocation1 [shape = 'u32[144,128]{1,0:T(1,128)}', space=vmem, size = 0x12000, scoped, tag = 'internal scratch']
  #allocation2 [shape = 'f32[32,128]{1,0:T(8,128)}', space=vmem, size = 0x4000, scoped, tag = 'scratch operand']
  %s0 = inlined_call_operand.hbm [shape: bf16[32,384], index: 0, kind: input, shape index: {}]
  %s1 = inlined_call_operand.hbm [shape: bf16[384,256], index: 1, kind: input, shape index: {}]
  %s2 = inlined_call_operand.vmem [shape: f32[1,256], index: 2, kind: input, shape index: {}]
  %s3 = inlined_call_operand.hbm [shape: f32[32,256], index: 3, kind: output, shape index: {}]
  %s4 = sld [smem:[#allocation0]]
  $region61: #{tpu_custom_call.1} parent=0
    _
  %s6 = ssub.s32 1, %s4
  %s7 = scalar_select 0, %s6, %s4
  $region1: #{tpu_custom_call.1} parent=0
    #allocation3 [shape = 'u8[24576]{0}', space=vmem, size = 0x6000, scoped, tag = 'input window, operand 0, single buffered']
    #allocation4 [shape = 's32[2]{0}', space=sflag, size = 0x8, scoped, tag = 'scoped memory for tpu_custom_call.1']
    #allocation5 [shape = 's32[2]{0}', space=sflag, size = 0x8, scoped, tag = 'scoped memory for tpu_custom_call.1']
    #allocation6 [shape = 'u8[196608]{0}', space=vmem, size = 0x30000, scoped, tag = 'input window, operand 1']
    #allocation7 [shape = 's32[2]{0}', space=sflag, size = 0x8, scoped, tag = 'scoped memory for tpu_custom_call.1']
    #allocation8 [shape = 'u8[32768]{0}', space=vmem, size = 0x8000, scoped, tag = 'output window, operand 0']
    %8 = vsyncpa [#allocation4], 0
    %9 = vsyncpa [#allocation7], 0
    %s10 = scalar_lea.sflag [#allocation7], 1
    %11 = vsyncpa %s10, 0
    %12 = vsyncpa [#allocation5], 0
    %s13 = scalar_lea.sflag [#allocation5], 1
    %14 = vsyncpa %s13, 0
    loop: start=0, step=1, limit=4
    $region2: #{tpu_custom_call.1} parent=1 // loop_pre_header
      _
    $region3: #{tpu_custom_call.1} parent=1 // loop_header
      %s16 = sphi 0, %s20
      %p17 = scmp.ge.s32.totalorder %s16, 4
      %s23 = sphi 0, %s42
      %s24 = sphi 0, %s38
      %s25 = sphi 0, %s34
      %s26 = sphi 0, %s23
      %s27 = sphi 0, %s24
      %s28 = sphi 0, %s25
      %s29 = sphi 0, %s26
      %s30 = sphi 0, %s27
      %s31 = sphi 0, %s28
      %s47 = sphi 0, %s49
      %s50 = sphi 0, %s47
      %s51 = sphi 0, %s50
      %s67 = sphi 0, %s51
      %s75 = sphi 0, %s77
      %s78 = sphi 0, %s75
      %s79 = sphi 0, %s78
      %s95 = sphi 0, %s79
      %s101 = sphi 0, %s103
      %s104 = sphi 0, %s101
      %s105 = sphi 0, %s104
      %s121 = sphi 0, %s105
      %s129 = sphi 0, %s131
      %s132 = sphi 0, %s129
      %s133 = sphi 0, %s132
      %s149 = sphi 0, %s133
    $region4: #{tpu_custom_call.1} parent=1 // loop_header_branch
      %19 = sbr.rel (%p17) target = $region8
    $region5: #{tpu_custom_call.1} parent=1 // loop_body
      %s21 = ssub.s32 %s16, 1
      %s22 = ssub.s32 %s16, 2
      %s32 = sadd.s32 1, %s25
      %p33 = scmp.ge.s32.totalorder %s32, 1
      %s34 = scalar_select %p33, 0, %s32
      %s35 = sadd.s32 1, %s24
      %s36 = scalar_select %p33, %s35, %s24
      %p37 = scmp.ge.s32.totalorder %s36, 2
      %s38 = scalar_select %p37, 0, %s36
      %s39 = sadd.s32 1, %s23
      %s40 = scalar_select %p37, %s39, %s23
      %p41 = scmp.ge.s32.totalorder %s40, 1
      %s42 = scalar_select %p41, 0, %s40
      %s43 = ssub.s32 %s23, %s42
      %s44 = ssub.s32 %s25, %s34
      %s45 = sor.u32 %s43, %s44
      %p46 = scmp.eq.s32.totalorder %s45, 0
      %s48 = sadd.s32 %s47, 1
      %s49 = scalar_select %p46, %s47, %s48
      %p52 = pneg %p46
      %p53 = scmp.eq.s32.totalorder %s16, 1
      %p54 = por %p52, %p53
      %p55 = scmp.ne.s32.totalorder %s47, %s50
      %p56 = scmp.eq.s32.totalorder %s16, 0
      %p57 = por %p55, %p56
      %p58 = scmp.ne.s32.totalorder %s47, %s50
      %p59 = scmp.eq.s32.totalorder %s21, 1
      %p60 = por %p58, %p59
      %p61 = scmp.ne.s32.totalorder %s50, %s51
      %p62 = scmp.eq.s32.totalorder %s21, 0
      %p63 = por %p61, %p62
      %p64 = scmp.ne.s32.totalorder %s50, %s51
      %p65 = scmp.eq.s32.totalorder %s22, 1
      %p66 = por %p64, %p65
      %p68 = scmp.ne.s32.totalorder %s51, %s67
      %p69 = scmp.eq.s32.totalorder %s22, 0
      %p70 = por %p68, %p69
      %s71 = ssub.s32 %s25, %s34
      %s72 = ssub.s32 %s24, %s38
      %s73 = sor.u32 %s71, %s72
      %p74 = scmp.eq.s32.totalorder %s73, 0
      %s76 = sadd.s32 %s75, 1
      %s77 = scalar_select %p74, %s75, %s76
      %p80 = pneg %p74
      %p81 = scmp.eq.s32.totalorder %s16, 1
      %p82 = por %p80, %p81
      %p83 = scmp.ne.s32.totalorder %s75, %s78
      %p84 = scmp.eq.s32.totalorder %s16, 0
      %p85 = por %p83, %p84
      %p86 = scmp.ne.s32.totalorder %s75, %s78
      %p87 = scmp.eq.s32.totalorder %s21, 1
      %p88 = por %p86, %p87
      %p89 = scmp.ne.s32.totalorder %s78, %s79
      %p90 = scmp.eq.s32.totalorder %s21, 0
      %p91 = por %p89, %p90
      %p92 = scmp.ne.s32.totalorder %s78, %s79
      %p93 = scmp.eq.s32.totalorder %s22, 1
      %p94 = por %p92, %p93
      %p96 = scmp.ne.s32.totalorder %s79, %s95
      %p97 = scmp.eq.s32.totalorder %s22, 0
      %p98 = por %p96, %p97
      %s99 = ssub.s32 %s24, %s38
      %p100 = scmp.eq.s32.totalorder %s99, 0
      %s102 = sadd.s32 %s101, 1
      %s103 = scalar_select %p100, %s101, %s102
      %p106 = pneg %p100
      %p107 = scmp.eq.s32.totalorder %s16, 1
      %p108 = por %p106, %p107
      %p109 = scmp.ne.s32.totalorder %s101, %s104
      %p110 = scmp.eq.s32.totalorder %s16, 0
      %p111 = por %p109, %p110
      %p112 = scmp.ne.s32.totalorder %s101, %s104
      %p113 = scmp.eq.s32.totalorder %s21, 1
      %p114 = por %p112, %p113
      %p115 = scmp.ne.s32.totalorder %s104, %s105
      %p116 = scmp.eq.s32.totalorder %s21, 0
      %p117 = por %p115, %p116
      %p118 = scmp.ne.s32.totalorder %s104, %s105
      %p119 = scmp.eq.s32.totalorder %s22, 1
      %p120 = por %p118, %p119
      %p122 = scmp.ne.s32.totalorder %s105, %s121
      %p123 = scmp.eq.s32.totalorder %s22, 0
      %p124 = por %p122, %p123
      %s125 = ssub.s32 %s23, %s42
      %s126 = ssub.s32 %s24, %s38
      %s127 = sor.u32 %s125, %s126
      %p128 = scmp.eq.s32.totalorder %s127, 0
      %s130 = sadd.s32 %s129, 1
      %s131 = scalar_select %p128, %s129, %s130
      %p134 = pneg %p128
      %p135 = scmp.eq.s32.totalorder %s16, 1
      %p136 = por %p134, %p135
      %p137 = scmp.ne.s32.totalorder %s129, %s132
      %p138 = scmp.eq.s32.totalorder %s16, 0
      %p139 = por %p137, %p138
      %p140 = scmp.ne.s32.totalorder %s129, %s132
      %p141 = scmp.eq.s32.totalorder %s21, 1
      %p142 = por %p140, %p141
      %p143 = scmp.ne.s32.totalorder %s132, %s133
      %p144 = scmp.eq.s32.totalorder %s21, 0
      %p145 = por %p143, %p144
      %p146 = scmp.ne.s32.totalorder %s132, %s133
      %p147 = scmp.eq.s32.totalorder %s22, 1
      %p148 = por %p146, %p147
      %p150 = scmp.ne.s32.totalorder %s133, %s149
      %p151 = scmp.eq.s32.totalorder %s22, 0
      %p152 = por %p150, %p151
      %p153 = scmp.le.s32.totalorder 1, %s16
      %p154 = scmp.lt.s32.totalorder %s16, 3
      %p155 = pnand %p153, %p154
      %p156 = pneg %p155
      // Predicated region
      $region9: #{tpu_custom_call.1} parent=5 // pred_check
        _
      $region10: #{tpu_custom_call.1} parent=5 // pred_check_branch
        %158 = sbr.rel (%p155) target = $region12
      $region11: #{tpu_custom_call.1} parent=5 // pred_region
        %s159 = ssub.s32 %s16, 1
        // Predicated region
        $region13: #{tpu_custom_call.1} parent=11 // pred_check
          %p160 = pneg %p63
        $region14: #{tpu_custom_call.1} parent=11 // pred_check_branch
          %162 = sbr.rel (%p160) target = $region16
        $region15: #{tpu_custom_call.1} parent=11 // pred_region
          %s163 = smul.u32 4, %s26
          %s164 = smul.u32 3, %s28
          %s166 = ssub.s32 768, 768
          %167 = vsyncadd [#allocation4], %s166
          %s168 = smul.addr %s163, 3
          %s169 = sadd.s32 %s164, %s168
          %s170 = smul.addr %s169, 64
          %s171 = scalar_lea.hbm %s0, %s170
          %s172 = sshll.u32 [#allocation3], 4
          %s173 = int_to_ptr.vmem [resolvable:$true] %s172
          %178 = dma.hbm_to_vmem [thread:$0]  %s171, 768, %s173, [#allocation4], 192, 192, 12
        $region16: #{tpu_custom_call.1} parent=11 // pred_fallthru
          _
      $region12: #{tpu_custom_call.1} parent=5 // pred_fallthru
        _
      %p179 = scmp.lt.s32.totalorder %s16, 2
      // Predicated region
      $region17: #{tpu_custom_call.1} parent=5 // pred_check
        %p180 = pneg %p179
      $region18: #{tpu_custom_call.1} parent=5 // pred_check_branch
        %182 = sbr.rel (%p180) target = $region20
      $region19: #{tpu_custom_call.1} parent=5 // pred_region
        // Predicated region
        $region21: #{tpu_custom_call.1} parent=19 // pred_check
          %p183 = pneg %p85
        $region22: #{tpu_custom_call.1} parent=19 // pred_check_branch
          %185 = sbr.rel (%p183) target = $region24
        $region23: #{tpu_custom_call.1} parent=19 // pred_region
          %s186 = sand.u32 %s75, 1
          %s187 = scalar_lea.sflag [#allocation7], %s186
          %s188 = sand.u32 %s75, 1
          %s189 = smul.addr %s188, 192
          %s190 = scalar_lea.vmem [#allocation6], %s189
          %s191 = smul.u32 48, %s25
          %s193 = ssub.s32 3072, 3072
          %194 = vsyncadd %s187, %s193
          %s195 = smul.addr %s191, 2
          %s196 = sadd.s32 %s24, %s195
          %s197 = smul.addr %s196, 64
          %s198 = scalar_lea.hbm %s1, %s197
          %s199 = sshll.u32 %s190, 4
          %s200 = int_to_ptr.vmem [resolvable:$true] %s199
          %205 = dma.hbm_to_vmem [thread:$0]  %s198, 3072, %s200, %s187, 128, 64, 4
        $region24: #{tpu_custom_call.1} parent=19 // pred_fallthru
          _
        // Predicated region
        $region25: #{tpu_custom_call.1} parent=19 // pred_check
          %p206 = pneg %p111
        $region26: #{tpu_custom_call.1} parent=19 // pred_check_branch
          %208 = sbr.rel (%p206) target = $region28
        $region27: #{tpu_custom_call.1} parent=19 // pred_region
          %p209 = scmp.lt.s32.totalorder %s24, 1
          %s210 = scalar_select %p209, %s24, 1
          %s211 = scalar_lea.vmem %s2, %s210
        $region28: #{tpu_custom_call.1} parent=19 // pred_fallthru
          _
      $region20: #{tpu_custom_call.1} parent=5 // pred_fallthru
        _
      %p212 = scmp.le.s32.totalorder 1, %s16
      %p213 = scmp.lt.s32.totalorder %s16, 3
      %p214 = pnand %p212, %p213
      %p215 = pneg %p214
      // Predicated region
      $region29: #{tpu_custom_call.1} parent=5 // pred_check
        _
      $region30: #{tpu_custom_call.1} parent=5 // pred_check_branch
        %217 = sbr.rel (%p214) target = $region32
      $region31: #{tpu_custom_call.1} parent=5 // pred_region
        %s218 = ssub.s32 %s16, 1
        // Predicated region
        $region33: #{tpu_custom_call.1} parent=31 // pred_check
          %p219 = pneg %p63
        $region34: #{tpu_custom_call.1} parent=31 // pred_check_branch
          %221 = sbr.rel (%p219) target = $region36
        $region35: #{tpu_custom_call.1} parent=31 // pred_region
          %222 = dma.done [#allocation4], 768
        $region36: #{tpu_custom_call.1} parent=31 // pred_fallthru
          _
        %s223 = sand.u32 %s78, 1
        %s224 = scalar_lea.sflag [#allocation7], %s223
        %s225 = sand.u32 %s78, 1
        %s226 = smul.addr %s225, 192
        %s227 = scalar_lea.vmem [#allocation6], %s226
        // Predicated region
        $region37: #{tpu_custom_call.1} parent=31 // pred_check
          %p228 = pneg %p91
        $region38: #{tpu_custom_call.1} parent=31 // pred_check_branch
          %230 = sbr.rel (%p228) target = $region40
        $region39: #{tpu_custom_call.1} parent=31 // pred_region
          %231 = dma.done %s224, 3072
        $region40: #{tpu_custom_call.1} parent=31 // pred_fallthru
          _
        %p232 = pneg %p63
        %p233 = pneg %p60
        %s234 = sand.u32 %s78, 1
        %s235 = scalar_lea.sflag [#allocation7], %s234
        %s236 = sand.u32 %s78, 1
        %s237 = smul.addr %s236, 192
        %s238 = scalar_lea.vmem [#allocation6], %s237
        %p239 = pneg %p91
        %p240 = pneg %p88
        %p241 = scmp.lt.s32.totalorder %s27, 1
        %s242 = scalar_select %p241, %s27, 1
        %s243 = scalar_lea.vmem %s2, %s242
        %p244 = pneg %p117
        %p245 = pneg %p114
        %p246 = pneg %p145
        %p247 = pneg %p142
        %s248 = sand.u32 %s132, 1
        %s249 = scalar_lea.sflag [#allocation5], %s248
        %s250 = sand.u32 %s132, 1
        %s251 = smul.addr %s250, 32
        %s252 = scalar_lea.vmem [#allocation8], %s251
        %s253 = smul.u32 4, %s26
        %s254 = smul.u32 3, %s28
        %s255 = smul.u32 48, %s28
        %p256 = scmp.lt.s32.totalorder %s27, 1
        %s257 = scalar_select %p256, %s27, 1
        %s258 = scalar_lea.vmem %s2, %s257
        %s259 = smul.u32 4, %s26
        %p261 = scmp.eq.s32.totalorder %s28, 0
        // Predicated region
        $region41: #{tpu_custom_call.1} parent=31 // pred_check
          %p262 = pneg %p261
        $region42: #{tpu_custom_call.1} parent=31 // pred_check_branch
          %264 = sbr.rel (%p262) target = $region44
        $region43: #{tpu_custom_call.1} parent=31 // pred_region
          %265 = vst [vmem:[#allocation2] sm:$0xff] 0.0
          %266 = vst [vmem:[#allocation2 + $0x8] sm:$0xff] 0.0
          %267 = vst [vmem:[#allocation2 + $0x10] sm:$0xff] 0.0
          %268 = vst [vmem:[#allocation2 + $0x18] sm:$0xff] 0.0
        $region44: #{tpu_custom_call.1} parent=31 // pred_fallthru
          _
        %v269 = vld [vmem:[#allocation2] sm:$0xff]
        %v270 = vld [vmem:[#allocation2 + $0x8] sm:$0xff]
        %v271 = vld [vmem:[#allocation2 + $0x10] sm:$0xff]
        %v272 = vld [vmem:[#allocation2 + $0x18] sm:$0xff]
        %v273 = vld [vmem:[#allocation3] sm:$0xff]
        %v274 = vld [vmem:[#allocation3 + $0x8] sm:$0xf]
        %v275 = vld [vmem:[#allocation3 + $0xc] sm:$0xff]
        %v276 = vld [vmem:[#allocation3 + $0x14] sm:$0xf]
        %v277 = vld [vmem:[#allocation3 + $0x18] sm:$0xff]
        %v278 = vld [vmem:[#allocation3 + $0x20] sm:$0xf]
        %v279 = vld [vmem:[#allocation3 + $0x24] sm:$0xff]
        %v280 = vld [vmem:[#allocation3 + $0x2c] sm:$0xf]
        %v281 = vld [vmem:[%s227] sm:$0xf]
        %v282 = vld [vmem:[%s227 + $0x4] sm:$0xf]
        %v283 = vld [vmem:[%s227 + $0x8] sm:$0xf]
        %v284 = vld [vmem:[%s227 + $0xc] sm:$0xf]
        %v285 = vld [vmem:[%s227 + $0x10] sm:$0xf]
        %v286 = vld [vmem:[%s227 + $0x14] sm:$0xf]
        %v287 = vld [vmem:[%s227 + $0x18] sm:$0xf]
        %v288 = vld [vmem:[%s227 + $0x1c] sm:$0xf]
        %v289 = vld [vmem:[%s227 + $0x20] sm:$0xf]
        %v290 = vld [vmem:[%s227 + $0x24] sm:$0xf]
        %v291 = vld [vmem:[%s227 + $0x28] sm:$0xf]
        %v292 = vld [vmem:[%s227 + $0x2c] sm:$0xf]
        %v293 = vld [vmem:[%s227 + $0x30] sm:$0xf]
        %v294 = vld [vmem:[%s227 + $0x34] sm:$0xf]
        %v295 = vld [vmem:[%s227 + $0x38] sm:$0xf]
        %v296 = vld [vmem:[%s227 + $0x3c] sm:$0xf]
        %v297 = vld [vmem:[%s227 + $0x40] sm:$0xf]
        %v298 = vld [vmem:[%s227 + $0x44] sm:$0xf]
        %v299 = vld [vmem:[%s227 + $0x48] sm:$0xf]
        %v300 = vld [vmem:[%s227 + $0x4c] sm:$0xf]
        %v301 = vld [vmem:[%s227 + $0x50] sm:$0xf]
        %v302 = vld [vmem:[%s227 + $0x54] sm:$0xf]
        %v303 = vld [vmem:[%s227 + $0x58] sm:$0xf]
        %v304 = vld [vmem:[%s227 + $0x5c] sm:$0xf]
        %v305 = vld [vmem:[%s227 + $0x60] sm:$0xf]
        %v306 = vld [vmem:[%s227 + $0x64] sm:$0xf]
        %v307 = vld [vmem:[%s227 + $0x68] sm:$0xf]
        %v308 = vld [vmem:[%s227 + $0x6c] sm:$0xf]
        %v309 = vld [vmem:[%s227 + $0x70] sm:$0xf]
        %v310 = vld [vmem:[%s227 + $0x74] sm:$0xf]
        %v311 = vld [vmem:[%s227 + $0x78] sm:$0xf]
        %v312 = vld [vmem:[%s227 + $0x7c] sm:$0xf]
        %v313 = vld [vmem:[%s227 + $0x80] sm:$0xf]
        %v314 = vld [vmem:[%s227 + $0x84] sm:$0xf]
        %v315 = vld [vmem:[%s227 + $0x88] sm:$0xf]
        %v316 = vld [vmem:[%s227 + $0x8c] sm:$0xf]
        %v317 = vld [vmem:[%s227 + $0x90] sm:$0xf]
        %v318 = vld [vmem:[%s227 + $0x94] sm:$0xf]
        %v319 = vld [vmem:[%s227 + $0x98] sm:$0xf]
        %v320 = vld [vmem:[%s227 + $0x9c] sm:$0xf]
        %v321 = vld [vmem:[%s227 + $0xa0] sm:$0xf]
        %v322 = vld [vmem:[%s227 + $0xa4] sm:$0xf]
        %v323 = vld [vmem:[%s227 + $0xa8] sm:$0xf]
        %v324 = vld [vmem:[%s227 + $0xac] sm:$0xf]
        %v325 = vld [vmem:[%s227 + $0xb0] sm:$0xf]
        %v326 = vld [vmem:[%s227 + $0xb4] sm:$0xf]
        %v327 = vld [vmem:[%s227 + $0xb8] sm:$0xf]
        %v328 = vld [vmem:[%s227 + $0xbc] sm:$0xf]
        %v337 = vunpack.c.l.b16 %v273
        %v338 = vunpack.c.h.b16 %v273
        %v339 = vunpack.c.l.b16 %v274
        %v340 = vunpack.c.l.b16 %v275
        %v341 = vunpack.c.h.b16 %v275
        %v342 = vunpack.c.l.b16 %v276
        %v343 = vunpack.c.l.b16 %v277
        %v344 = vunpack.c.h.b16 %v277
        %v345 = vunpack.c.l.b16 %v278
        %v346 = vunpack.c.l.b16 %v279
        %v347 = vunpack.c.h.b16 %v279
        %v348 = vunpack.c.l.b16 %v280
        %v349 = vpack.c.b16 %v340, %v337
        %v350 = vpack.c.b16 %v341, %v338
        %v351 = vpack.c.b16 %v342, %v339
        %v352 = vpack.c.b16 %v346, %v343
        %v353 = vpack.c.b16 %v347, %v344
        %v354 = vpack.c.b16 %v348, %v345
        %v409 = vunpack.c.l.b16 %v281
        %v410 = vunpack.c.l.b16 %v282
        %v411 = vunpack.c.l.b16 %v283
        %v412 = vunpack.c.l.b16 %v284
        %v413 = vunpack.c.l.b16 %v285
        %v414 = vunpack.c.l.b16 %v286
        %v415 = vunpack.c.l.b16 %v287
        %v416 = vunpack.c.l.b16 %v288
        %v417 = vunpack.c.l.b16 %v289
        %v418 = vunpack.c.l.b16 %v290
        %v419 = vunpack.c.l.b16 %v291
        %v420 = vunpack.c.l.b16 %v292
        %v421 = vunpack.c.l.b16 %v293
        %v422 = vunpack.c.l.b16 %v294
        %v423 = vunpack.c.l.b16 %v295
        %v424 = vunpack.c.l.b16 %v296
        %v425 = vunpack.c.l.b16 %v297
        %v426 = vunpack.c.l.b16 %v298
        %v427 = vunpack.c.l.b16 %v299
        %v428 = vunpack.c.l.b16 %v300
        %v429 = vunpack.c.l.b16 %v301
        %v430 = vunpack.c.l.b16 %v302
        %v431 = vunpack.c.l.b16 %v303
        %v432 = vunpack.c.l.b16 %v304
        %v433 = vunpack.c.l.b16 %v305
        %v434 = vunpack.c.l.b16 %v306
        %v435 = vunpack.c.l.b16 %v307
        %v436 = vunpack.c.l.b16 %v308
        %v437 = vunpack.c.l.b16 %v309
        %v438 = vunpack.c.l.b16 %v310
        %v439 = vunpack.c.l.b16 %v311
        %v440 = vunpack.c.l.b16 %v312
        %v441 = vunpack.c.l.b16 %v313
        %v442 = vunpack.c.l.b16 %v314
        %v443 = vunpack.c.l.b16 %v315
        %v444 = vunpack.c.l.b16 %v316
        %v445 = vunpack.c.l.b16 %v317
        %v446 = vunpack.c.l.b16 %v318
        %v447 = vunpack.c.l.b16 %v319
        %v448 = vunpack.c.l.b16 %v320
        %v449 = vunpack.c.l.b16 %v321
        %v450 = vunpack.c.l.b16 %v322
        %v451 = vunpack.c.l.b16 %v323
        %v452 = vunpack.c.l.b16 %v324
        %v453 = vunpack.c.l.b16 %v325
        %v454 = vunpack.c.l.b16 %v326
        %v455 = vunpack.c.l.b16 %v327
        %v456 = vunpack.c.l.b16 %v328
        %v457 = vpack.c.b16 %v410, %v409
        %v458 = vpack.c.b16 %v412, %v411
        %v459 = vpack.c.b16 %v414, %v413
        %v460 = vpack.c.b16 %v416, %v415
        %v461 = vpack.c.b16 %v418, %v417
        %v462 = vpack.c.b16 %v420, %v419
        %v463 = vpack.c.b16 %v422, %v421
        %v464 = vpack.c.b16 %v424, %v423
        %v465 = vpack.c.b16 %v426, %v425
        %v466 = vpack.c.b16 %v428, %v427
        %v467 = vpack.c.b16 %v430, %v429
        %v468 = vpack.c.b16 %v432, %v431
        %v469 = vpack.c.b16 %v434, %v433
        %v470 = vpack.c.b16 %v436, %v435
        %v471 = vpack.c.b16 %v438, %v437
        %v472 = vpack.c.b16 %v440, %v439
        %v473 = vpack.c.b16 %v442, %v441
        %v474 = vpack.c.b16 %v444, %v443
        %v475 = vpack.c.b16 %v446, %v445
        %v476 = vpack.c.b16 %v448, %v447
        %v477 = vpack.c.b16 %v450, %v449
        %v478 = vpack.c.b16 %v452, %v451
        %v479 = vpack.c.b16 %v454, %v453
        %v480 = vpack.c.b16 %v456, %v455
        %505 = vmatprep.subr.bf16.mxu0 0
        %506 = vmatpush1.bf16.msra.mxu0 %v457
        %507 = vmatprep.subr.bf16.mxu0 0
        %508 = vmatpush1.bf16.msra.mxu0 %v458
        %509 = vmatprep.subr.bf16.mxu0 0
        %510 = vmatpush1.bf16.msra.mxu0 %v459
        %511 = vmatprep.subr.bf16.mxu0 0
        %512 = vmatpush1.bf16.msra.mxu0 %v460
        %513 = vmatprep.subr.bf16.mxu0 0
        %514 = vmatpush1.bf16.msra.mxu0 %v461
        %515 = vmatprep.subr.bf16.mxu0 0
        %516 = vmatpush1.bf16.msra.mxu0 %v462
        %517 = vmatprep.subr.bf16.mxu0 0
        %518 = vmatpush1.bf16.msra.mxu0 %v463
        %519 = vmatprep.subr.bf16.mxu0 0
        %520 = vmatpush1.bf16.msra.mxu0 %v464
        %521 = vmatprep.subr.bf16.mxu0 0
        %522 = vmatpush1.bf16.msra.mxu0 %v465
        %523 = vmatprep.subr.bf16.mxu0 0
        %524 = vmatpush1.bf16.msra.mxu0 %v466
        %525 = vmatprep.subr.bf16.mxu0 0
        %526 = vmatpush1.bf16.msra.mxu0 %v467
        %527 = vmatprep.subr.bf16.mxu0 0
        %528 = vmatpush1.bf16.msra.mxu0 %v468
        %529 = vmatprep.subr.bf16.mxu0 0
        %530 = vmatpush1.bf16.msra.mxu0 %v469
        %531 = vmatprep.subr.bf16.mxu0 0
        %532 = vmatpush1.bf16.msra.mxu0 %v470
        %533 = vmatprep.subr.bf16.mxu0 0
        %534 = vmatpush1.bf16.msra.mxu0 %v471
        %535 = vmatprep.subr.bf16.mxu0 0
        %536 = vmatpush1.bf16.msra.mxu0 %v472
        %537 = vmatprep.mubr.bf16.mxu0 %v350
        %538 = vmatmul.mubr.bf16.gmra.mrb[0].mxu0 %v349
        %v539 = vpop.f32.mrb[0].mxu0
        %v540 = vadd.f32 0.0, %v539
        %v541 = vpop.f32.mrb[0].mxu0
        %v542 = vpop.f32.mrb[0].mxu0
        %v543 = vadd.f32 0.0, %v542
        %v544 = vpop.f32.mrb[0].mxu0
        %545 = vmatprep.mubr.bf16.mxu0 %v353
        %546 = vmatmul.mubr.bf16.gmra.mrb[0].mxu0 %v352
        %v547 = vpop.f32.mrb[0].mxu0
        %v548 = vadd.f32 0.0, %v547
        %v549 = vpop.f32.mrb[0].mxu0
        %v550 = vpop.f32.mrb[0].mxu0
        %v551 = vadd.f32 0.0, %v550
        %v552 = vpop.f32.mrb[0].mxu0
        %553 = vdwg.mxu0
        %554 = vmatprep.subr.bf16.mxu0 0
        %555 = vmatpush1.bf16.msra.mxu0 %v473
        %556 = vmatprep.subr.bf16.mxu0 0
        %557 = vmatpush1.bf16.msra.mxu0 %v474
        %558 = vmatprep.subr.bf16.mxu0 0
        %559 = vmatpush1.bf16.msra.mxu0 %v475
        %560 = vmatprep.subr.bf16.mxu0 0
        %561 = vmatpush1.bf16.msra.mxu0 %v476
        %562 = vmatprep.subr.bf16.mxu0 0
        %563 = vmatpush1.bf16.msra.mxu0 %v477
        %564 = vmatprep.subr.bf16.mxu0 0
        %565 = vmatpush1.bf16.msra.mxu0 %v478
        %566 = vmatprep.subr.bf16.mxu0 0
        %567 = vmatpush1.bf16.msra.mxu0 %v479
        %568 = vmatprep.subr.bf16.mxu0 0
        %569 = vmatpush1.bf16.msra.mxu0 %v480
        %570 = vmatprep.subr.bf16.mxu0 0
        %571 = vmatpush1.bf16.msra.mxu0 0
        %572 = vmatprep.subr.bf16.mxu0 0
        %573 = vmatpush1.bf16.msra.mxu0 0
        %574 = vmatprep.subr.bf16.mxu0 0
        %575 = vmatpush1.bf16.msra.mxu0 0
        %576 = vmatprep.subr.bf16.mxu0 0
        %577 = vmatpush1.bf16.msra.mxu0 0
        %578 = vmatprep.subr.bf16.mxu0 0
        %579 = vmatpush1.bf16.msra.mxu0 0
        %580 = vmatprep.subr.bf16.mxu0 0
        %581 = vmatpush1.bf16.msra.mxu0 0
        %582 = vmatprep.subr.bf16.mxu0 0
        %583 = vmatpush1.bf16.msra.mxu0 0
        %584 = vmatprep.subr.bf16.mxu0 0
        %585 = vmatpush1.bf16.msra.mxu0 0
        %586 = vmatprep.mubr.bf16.mxu0 0
        %587 = vmatmul.mubr.bf16.gmra.mrb[0].mxu0 %v351
        %v588 = vpop.f32.mrb[0].mxu0
        %v589 = vadd.f32 %v540, %v588
        %v590 = vpop.f32.mrb[0].mxu0
        %v591 = vpop.f32.mrb[0].mxu0
        %v592 = vadd.f32 %v543, %v591
        %v593 = vpop.f32.mrb[0].mxu0
        %594 = vmatprep.mubr.bf16.mxu0 0
        %595 = vmatmul.mubr.bf16.gmra.mrb[0].mxu0 %v354
        %v596 = vpop.f32.mrb[0].mxu0
        %v597 = vadd.f32 %v548, %v596
        %v598 = vpop.f32.mrb[0].mxu0
        %v599 = vpop.f32.mrb[0].mxu0
        %v600 = vadd.f32 %v551, %v599
        %v601 = vpop.f32.mrb[0].mxu0
        %602 = vdwg.mxu0
        %v603 = vadd.f32 %v269, %v589
        %v604 = vadd.f32 %v270, %v592
        %v605 = vadd.f32 %v271, %v597
        %v606 = vadd.f32 %v272, %v600
        %607 = vst [vmem:[#allocation2] sm:$0xff] %v603
        %608 = vst [vmem:[#allocation2 + $0x8] sm:$0xff] %v604
        %609 = vst [vmem:[#allocation2 + $0x10] sm:$0xff] %v605
        %610 = vst [vmem:[#allocation2 + $0x18] sm:$0xff] %v606
        // Predicated region
        $region45: #{tpu_custom_call.1} parent=31 // pred_check
          %p611 = pneg %p261
        $region46: #{tpu_custom_call.1} parent=31 // pred_check_branch
          %613 = sbr.rel (%p611) target = $region48
        $region47: #{tpu_custom_call.1} parent=31 // pred_region
          %v614 = vld [vmem:[#allocation2] sm:$0xff]
          %v615 = vld [vmem:[#allocation2 + $0x8] sm:$0xff]
          %v616 = vld [vmem:[#allocation2 + $0x10] sm:$0xff]
          %v617 = vld [vmem:[#allocation2 + $0x18] sm:$0xff]
          %v618 = vld [vmem:[%s258] sm:$0x1]
          %v620 = vlaneseq
          %v621 = vshrl.u32 %v620, 7
          %v622 = vsub.s32 0, %v621
          %v623 = vrot.slane %v618, %v622
          %v625 = vadd.f32 %v614, %v623
          %v626 = vadd.f32 %v615, %v623
          %v627 = vadd.f32 %v616, %v623
          %v628 = vadd.f32 %v617, %v623
          %629 = vst [vmem:[%s252] sm:$0xff] %v625
          %630 = vst [vmem:[%s252 + $0x8] sm:$0xff] %v626
          %631 = vst [vmem:[%s252 + $0x10] sm:$0xff] %v627
          %632 = vst [vmem:[%s252 + $0x18] sm:$0xff] %v628
        $region48: #{tpu_custom_call.1} parent=31 // pred_fallthru
          _
        %s633 = sand.u32 %s132, 1
        %s634 = scalar_lea.sflag [#allocation5], %s633
        %s635 = sand.u32 %s132, 1
        %s636 = smul.addr %s635, 32
        %s637 = scalar_lea.vmem [#allocation8], %s636
        // Predicated region
        $region49: #{tpu_custom_call.1} parent=31 // pred_check
          %p638 = pneg %p142
        $region50: #{tpu_custom_call.1} parent=31 // pred_check_branch
          %640 = sbr.rel (%p638) target = $region52
        $region51: #{tpu_custom_call.1} parent=31 // pred_region
          %s641 = smul.u32 4, %s26
          %s643 = ssub.s32 512, 512
          %644 = vsyncadd %s634, %s643
          %s645 = smul.addr %s641, 2
          %s646 = sadd.s32 %s27, %s645
          %s647 = smul.addr %s646, 128
          %s648 = scalar_lea.hbm %s3, %s647
          %s649 = sshll.u32 %s637, 4
          %s650 = int_to_ptr.vmem [resolvable:$true] %s649
          %655 = dma.vmem_to_hbm [thread:$0]  %s650, 512, %s648, %s634, 128, 256, 8
        $region52: #{tpu_custom_call.1} parent=31 // pred_fallthru
          _
      $region32: #{tpu_custom_call.1} parent=5 // pred_fallthru
        _
      %p656 = scmp.le.s32.totalorder 2, %s16
      // Predicated region
      $region53: #{tpu_custom_call.1} parent=5 // pred_check
        %p657 = pneg %p656
      $region54: #{tpu_custom_call.1} parent=5 // pred_check_branch
        %659 = sbr.rel (%p657) target = $region56
      $region55: #{tpu_custom_call.1} parent=5 // pred_region
        %s660 = ssub.s32 %s16, 2
        // Predicated region
        $region57: #{tpu_custom_call.1} parent=55 // pred_check
          %p661 = pneg %p148
        $region58: #{tpu_custom_call.1} parent=55 // pred_check_branch
          %663 = sbr.rel (%p661) target = $region60
        $region59: #{tpu_custom_call.1} parent=55 // pred_region
          %s664 = sand.u32 %s133, 1
          %s665 = scalar_lea.sflag [#allocation5], %s664
          %s666 = sand.u32 %s133, 1
          %s667 = smul.addr %s666, 32
          %s668 = scalar_lea.vmem [#allocation8], %s667
          %669 = dma.done %s665, 512
        $region60: #{tpu_custom_call.1} parent=55 // pred_fallthru
          _
      $region56: #{tpu_custom_call.1} parent=5 // pred_fallthru
        _
    $region6: #{tpu_custom_call.1} parent=1 // loop_footer
      %s20 = sadd.s32 1, %s16
    $region7: #{tpu_custom_call.1} parent=1 // loop_footer_branch
      %15 = sbr.rel target = $region3
    $region8: #{tpu_custom_call.1} parent=1 // loop_exit
      _
    %670 = vsyncpa [#allocation4], 1
    %s671 = scalar_lea.sflag [#allocation4], 1
    %672 = vsyncpa %s671, 1
    %673 = vsyncpa [#allocation7], 1
    %s674 = scalar_lea.sflag [#allocation7], 1
    %675 = vsyncpa %s674, 1
    %676 = vsyncpa [#allocation5], 1
    %s677 = scalar_lea.sflag [#allocation5], 1
    %678 = vsyncpa %s677, 1

</llo_original>
